<compile_context>
chip_gen: v5e
topology: v5e:2x2
jax: 0.10.0
libtpu: 0.0.40
codegen_flags: <defaults>
</compile_context>

<pallas_src>
from functools import partial

import jax
import jax.numpy as jnp
import numpy as np
from jax.experimental import pallas as pl
from jax.experimental.pallas import tpu as pltpu

_TARGET_BLOCK = 2 << 20   # ~2 MiB blocks: ~85% of HBM roofline in tile sweeps


# ---------------------------------------------------------------------------
# Shared squeeze-excite gate math (VPU/XLU only; mid = C//reduction is tiny).
# ---------------------------------------------------------------------------
def _se_gate(pooled, w1t, b1, w2, b2, alpha):
    """pooled: (B, C) f32  ->  sigmoid gate (B, C) f32."""
    # 1x1 conv #1 (C -> mid): broadcast-multiply + sublane reduce.  w1t = W1^T (C, mid).
    y1 = jnp.sum(pooled[:, :, None] * w1t[None, :, :], axis=1) + b1       # (B, mid)
    # PReLU with a single shared parameter.
    y1 = jnp.where(y1 >= 0, y1, alpha * y1)
    # 1x1 conv #2 (mid -> C): broadcast-multiply + lane reduce.  w2 native (C, mid).
    y2 = jnp.sum(y1[:, None, :] * w2[None, :, :], axis=2) + b2            # (B, C)
    return jax.nn.sigmoid(y2)


# ---------------------------------------------------------------------------
# Fused single-pass kernel: one (B_TILE, C, HW) block per grid step.
# ---------------------------------------------------------------------------
def _ca_fused_kernel(alpha_ref, x_ref, w1t_ref, b1_ref, w2_ref, b2_ref, o_ref,
                     *, inv_hw):
    # Cast-fused pool: no full-slab f32 value stays live across the kernel.
    pooled = jnp.sum(x_ref[...].astype(jnp.float32), axis=2) * inv_hw     # (B, C) f32
    gate = _se_gate(pooled, w1t_ref[...], b1_ref[...], w2_ref[...],
                    b2_ref[...], alpha_ref[0])                            # (B, C) f32
    # Final scale directly from x_ref in the input dtype (one VPU pass over slab).
    o_ref[...] = x_ref[...] * gate[:, :, None].astype(o_ref.dtype)


# ---------------------------------------------------------------------------
# Two-pass fallback for slabs too big for VMEM: pool pass + scale pass.
# ---------------------------------------------------------------------------
def _ca_pool_kernel(alpha_ref, x_ref, w1t_ref, b1_ref, w2_ref, b2_ref, gate_ref,
                    *, hw, hw_tile, inv_hw, needs_mask):
    h = pl.program_id(1)

    @pl.when(h == 0)
    def _init():
        gate_ref[...] = jnp.zeros_like(gate_ref)

    xs = x_ref[...].astype(jnp.float32)                                   # (1, C, hw_tile)
    if needs_mask:  # ragged last HW tile: zero the out-of-range lanes
        lane = jax.lax.broadcasted_iota(jnp.int32, xs.shape, 2)
        xs = jnp.where(h * hw_tile + lane < hw, xs, 0.0)
    gate_ref[...] += jnp.sum(xs, axis=2, keepdims=True)                   # (1, C, 1)

    @pl.when(h == pl.num_programs(1) - 1)
    def _finalize():
        pooled = gate_ref[...][:, :, 0] * inv_hw                          # (1, C)
        g = _se_gate(pooled, w1t_ref[...], b1_ref[...], w2_ref[...],
                     b2_ref[...], alpha_ref[0])
        gate_ref[...] = g[:, :, None]                                     # store gate


def _ca_scale_kernel(gate_ref, x_ref, o_ref):
    # gate_ref: (1, C, 1) f32; scale in the input dtype.
    o_ref[...] = x_ref[...] * gate_ref[...].astype(o_ref.dtype)


# ---------------------------------------------------------------------------
# Sizing helpers.
# ---------------------------------------------------------------------------
def _vmem_capacity_bytes():
    try:
        return int(pltpu.get_tpu_info().vmem_capacity_bytes)
    except Exception:
        return 64 << 20   # conservative default (v7x per-core VMEM)


def _vmem_limit(need_bytes, cap_bytes):
    # At least what the blocks need (plus Mosaic slack), never above physical.
    lim = max(int(need_bytes), 32 << 20)
    return int(min(lim, max(cap_bytes - (2 << 20), int(need_bytes))))


def _pick_batch_tile(n, block_bytes, per_unit_bytes, budget_bytes):
    """Smallest divisor of n whose block reaches ~2 MiB, within the VMEM budget."""
    best = 1
    for d in range(1, n + 1):
        if n % d:
            continue
        if d * per_unit_bytes > budget_bytes:
            break
        best = d
        if d * block_bytes >= _TARGET_BLOCK:
            break
    return best


# ---------------------------------------------------------------------------
# Public wrapper.
# ---------------------------------------------------------------------------
def ca_layer(x_nchw, w1, b1, w2, b2, prelu_alpha, *, force_two_pass=False):
    """CALayer forward.  x_nchw: (N, C, H, W); w1: (mid, C); w2: (C, mid)."""
    N, C, H, W = x_nchw.shape
    mid = w1.shape[0]
    HW = H * W
    itemsize = jnp.dtype(x_nchw.dtype).itemsize

    # Free reshape: keep NCHW channel ordering, H*W on the lane axis.
    # TODO(synk): if H*W is not a multiple of 128 the output stores are masked
    # (vst.msk); padding the lane axis in the wrapper would recover full rate.
    x = x_nchw.reshape(N, C, HW)

    # Parameters shaped so the kernel's reduces / broadcasts line up.
    w1_t = jnp.asarray(w1, jnp.float32).T                  # (C, mid)
    w2_n = jnp.asarray(w2, jnp.float32)                    # (C, mid)  native Conv2d layout
    b1_2d = jnp.asarray(b1, jnp.float32).reshape(1, mid)
    b2_2d = jnp.asarray(b2, jnp.float32).reshape(1, C)
    alpha = jnp.asarray(prelu_alpha, jnp.float32).reshape(1)

    cap = _vmem_capacity_bytes()
    budget = int(cap * 0.75)                               # leave Mosaic headroom
    param_bytes = 4 * (2 * C * mid + mid + C) + 4096

    per_batch = C * HW * itemsize                          # one (C, HW) slab
    per_batch_f32 = C * HW * 4
    # Double-buffered in + out blocks, plus a possible transient f32 reduce copy.
    per_unit = 4 * per_batch + per_batch_f32

    use_fused = (not force_two_pass) and \
        (per_unit + param_bytes + (2 << 20) <= budget)

    alpha_spec = pl.BlockSpec(memory_space=pltpu.SMEM)     # PReLU alpha (scalar)

    if use_fused:
        # ---------------- Fused single-pass (1 read + 1 write of x) ----------
        b_tile = _pick_batch_tile(N, per_batch, per_unit,
                                  budget - param_bytes - (2 << 20))
        need = b_tile * per_unit + param_bytes + (2 << 20)

        out = pl.pallas_call(
            partial(_ca_fused_kernel, inv_hw=1.0 / HW),
            out_shape=jax.ShapeDtypeStruct((N, C, HW), x.dtype),
            grid=(N // b_tile,),
            in_specs=[
                alpha_spec,
                pl.BlockSpec((b_tile, C, HW), lambda b: (b, 0, 0)),   # x block
                pl.BlockSpec((C, mid), lambda b: (0, 0)),             # W1^T
                pl.BlockSpec((1, mid), lambda b: (0, 0)),             # b1
                pl.BlockSpec((C, mid), lambda b: (0, 0)),             # W2
                pl.BlockSpec((1, C), lambda b: (0, 0)),               # b2
            ],
            out_specs=pl.BlockSpec((b_tile, C, HW), lambda b: (b, 0, 0)),
            compiler_params=pltpu.CompilerParams(
                dimension_semantics=("parallel",),
                vmem_limit_bytes=_vmem_limit(need, cap)),
        )(alpha, x, w1_t, b1_2d, w2_n, b2_2d)
        return out.reshape(N, C, H, W)

    # ---------------- Two-pass HW-tiled fallback (slab too big for VMEM) -----
    if HW >= 128:
        max_lanes = max(128, (_TARGET_BLOCK // (C * itemsize)) // 128 * 128)
        hw_tile = min(HW if HW % 128 == 0 else (HW // 128) * 128, max_lanes)
    else:
        hw_tile = HW
    n_hw = int(pl.cdiv(HW, hw_tile))
    needs_mask = (HW % hw_tile) != 0

    tile_bytes = C * hw_tile * itemsize
    need = 4 * tile_bytes + C * hw_tile * 4 + param_bytes + (2 << 20)
    vmem_limit = _vmem_limit(need, cap)

    # Pass 1: global average pool over an "arbitrary" HW axis; the SE gate is
    # computed in the finalize step so the intermediate is just (N, C, 1) f32.
    # TODO(synk): split the pool pass across v7x's two TCs (cross-core combine)
    # when N == 1; currently only the scale pass uses both cores in that case.
    gate = pl.pallas_call(
        partial(_ca_pool_kernel, hw=HW, hw_tile=hw_tile, inv_hw=1.0 / HW,
                needs_mask=needs_mask),
        out_shape=jax.ShapeDtypeStruct((N, C, 1), jnp.float32),
        grid=(N, n_hw),
        in_specs=[
            alpha_spec,
            pl.BlockSpec((1, C, hw_tile), lambda b, h: (b, 0, h)),    # x tile
            pl.BlockSpec((C, mid), lambda b, h: (0, 0)),              # W1^T
            pl.BlockSpec((1, mid), lambda b, h: (0, 0)),              # b1
            pl.BlockSpec((C, mid), lambda b, h: (0, 0)),              # W2
            pl.BlockSpec((1, C), lambda b, h: (0, 0)),                # b2
        ],
        out_specs=pl.BlockSpec((1, C, 1), lambda b, h: (b, 0, 0)),
        compiler_params=pltpu.CompilerParams(
            dimension_semantics=("parallel", "arbitrary"),
            vmem_limit_bytes=vmem_limit),
    )(alpha, x, w1_t, b1_2d, w2_n, b2_2d)

    # Pass 2: scale.  Both axes "parallel" so both v7x TensorCores share the
    # work even when N == 1.
    out = pl.pallas_call(
        _ca_scale_kernel,
        out_shape=jax.ShapeDtypeStruct((N, C, HW), x.dtype),
        grid=(N, n_hw),
        in_specs=[
            pl.BlockSpec((1, C, 1), lambda b, h: (b, 0, 0)),          # gate
            pl.BlockSpec((1, C, hw_tile), lambda b, h: (b, 0, h)),    # x tile
        ],
        out_specs=pl.BlockSpec((1, C, hw_tile), lambda b, h: (b, 0, h)),
        compiler_params=pltpu.CompilerParams(
            dimension_semantics=("parallel", "parallel"),
            vmem_limit_bytes=vmem_limit),
    )(gate, x)

    return out.reshape(N, C, H, W)


# ---------------------------------------------------------------------------
# Pure-JAX reference of the PyTorch forward (NCHW).
# ---------------------------------------------------------------------------
def _reference(x, w1, b1, w2, b2, alpha):
    pooled = jnp.mean(x.astype(jnp.float32), axis=(2, 3))  # (N, C)
    y1 = pooled @ w1.T + b1                                # (N, mid)
    y1 = jnp.where(y1 >= 0, y1, alpha * y1)
    y2 = y1 @ w2.T + b2                                    # (N, C)
    gate = jax.nn.sigmoid(y2)
    return x * gate[:, :, None, None].astype(x.dtype)


if __name__ == "__main__":
    # channel=32, reduction=16 -> mid=2 (default CALayer config, kept small).
    N, C, H, W = 2, 32, 16, 16
    reduction = 16
    mid = C // reduction

    key = jax.random.PRNGKey(0)
    kx, k1, kb1, k2, kb2 = jax.random.split(key, 5)

    x = jax.random.normal(kx, (N, C, H, W), dtype=jnp.float32)
    # Conv2d(C, mid, 1) weight (mid, C, 1, 1) -> (mid, C); Conv2d(mid, C, 1) -> (C, mid)
    w1 = jax.random.normal(k1, (mid, C), dtype=jnp.float32) * 0.1
    b1 = jax.random.normal(kb1, (mid,), dtype=jnp.float32) * 0.1
    w2 = jax.random.normal(k2, (C, mid), dtype=jnp.float32) * 0.1
    b2 = jax.random.normal(kb2, (C,), dtype=jnp.float32) * 0.1
    prelu_alpha = 0.25  # nn.PReLU() default init

    ref = _reference(x, w1, b1, w2, b2, prelu_alpha)

    # Fused single-pass path (default for these shapes).
    out_fused = jax.block_until_ready(ca_layer(x, w1, b1, w2, b2, prelu_alpha))
    np.testing.assert_allclose(np.asarray(out_fused), np.asarray(ref),
                               rtol=1e-5, atol=1e-5)

    # Also exercise the HW-tiled two-pass fallback (used when slabs exceed VMEM).
    out_two = jax.block_until_ready(
        ca_layer(x, w1, b1, w2, b2, prelu_alpha, force_two_pass=True))
    np.testing.assert_allclose(np.asarray(out_two), np.asarray(ref),
                               rtol=1e-5, atol=1e-5)

    print("KERNEL_OK")
</pallas_src>

<mosaic_0001>
module attributes {stable_mosaic.version = 11 : i64} {
  func.func @_ca_fused_kernel(%arg0: i32, %arg1: memref<1xf32, #tpu.memory_space<smem>>, %arg2: memref<2x32x256xf32, #tpu.memory_space<vmem>>, %arg3: memref<32x2xf32, #tpu.memory_space<vmem>>, %arg4: memref<1x2xf32, #tpu.memory_space<vmem>>, %arg5: memref<32x2xf32, #tpu.memory_space<vmem>>, %arg6: memref<1x32xf32, #tpu.memory_space<vmem>>, %arg7: memref<2x32x256xf32, #tpu.memory_space<vmem>>) attributes {dimension_semantics = [#tpu.dimension_semantics<parallel>], iteration_bounds = array<i64: 1>, scalar_prefetch = 0 : i64, scratch_operands = 0 : i64, tpu.core_type = #tpu.core_type<tc>, window_params = [{transform_indices = @transform_0, window_bounds = array<i64: 1>}, {transform_indices = @transform_1, window_bounds = array<i64: 2, 32, 256>}, {pipeline_mode = #tpu.pipeline_mode<synchronous>, transform_indices = @transform_2, window_bounds = array<i64: 32, 2>}, {pipeline_mode = #tpu.pipeline_mode<synchronous>, transform_indices = @transform_3, window_bounds = array<i64: 1, 2>}, {pipeline_mode = #tpu.pipeline_mode<synchronous>, transform_indices = @transform_4, window_bounds = array<i64: 32, 2>}, {pipeline_mode = #tpu.pipeline_mode<synchronous>, transform_indices = @transform_5, window_bounds = array<i64: 1, 32>}, {transform_indices = @transform_6, window_bounds = array<i64: 2, 32, 256>}]} {
    %c0 = arith.constant 0 : index
    %c0_0 = arith.constant 0 : index
    %c0_1 = arith.constant 0 : index
    %0 = vector.load %arg2[%c0, %c0_0, %c0_1] : memref<2x32x256xf32, #tpu.memory_space<vmem>>, vector<2x32x256xf32>
    %cst = arith.constant dense<0.000000e+00> : vector<2x32xf32>
    %1 = vector.multi_reduction <add>, %0, %cst [2] : vector<2x32x256xf32> to vector<2x32xf32>
    %cst_2 = arith.constant 3.906250e-03 : f32
    %2 = vector.broadcast %cst_2 : f32 to vector<2x32xf32>
    %3 = arith.mulf %1, %2 : vector<2x32xf32>
    %c0_3 = arith.constant 0 : index
    %c0_4 = arith.constant 0 : index
    %4 = vector.load %arg3[%c0_3, %c0_4] : memref<32x2xf32, #tpu.memory_space<vmem>>, vector<32x2xf32>
    %c0_5 = arith.constant 0 : index
    %c0_6 = arith.constant 0 : index
    %5 = vector.load %arg4[%c0_5, %c0_6] : memref<1x2xf32, #tpu.memory_space<vmem>>, vector<1x2xf32>
    %c0_7 = arith.constant 0 : index
    %c0_8 = arith.constant 0 : index
    %6 = vector.load %arg5[%c0_7, %c0_8] : memref<32x2xf32, #tpu.memory_space<vmem>>, vector<32x2xf32>
    %c0_9 = arith.constant 0 : index
    %c0_10 = arith.constant 0 : index
    %7 = vector.load %arg6[%c0_9, %c0_10] : memref<1x32xf32, #tpu.memory_space<vmem>>, vector<1x32xf32>
    %c0_11 = arith.constant 0 : index
    %8 = memref.load %arg1[%c0_11] : memref<1xf32, #tpu.memory_space<smem>>
    %9 = vector.shape_cast %3 : vector<2x32xf32> to vector<2x32x1xf32>
    %10 = vector.shape_cast %4 : vector<32x2xf32> to vector<1x32x2xf32>
    %11 = vector.broadcast %9 : vector<2x32x1xf32> to vector<2x32x2xf32>
    %12 = vector.broadcast %10 : vector<1x32x2xf32> to vector<2x32x2xf32>
    %13 = arith.mulf %11, %12 : vector<2x32x2xf32>
    %cst_12 = arith.constant dense<0.000000e+00> : vector<2x2xf32>
    %14 = vector.multi_reduction <add>, %13, %cst_12 [1] : vector<2x32x2xf32> to vector<2x2xf32>
    %15 = vector.broadcast %5 : vector<1x2xf32> to vector<2x2xf32>
    %16 = arith.addf %14, %15 : vector<2x2xf32>
    %cst_13 = arith.constant 0.000000e+00 : f32
    %17 = vector.broadcast %cst_13 : f32 to vector<2x2xf32>
    %18 = arith.cmpf oge, %16, %17 : vector<2x2xf32>
    %19 = vector.broadcast %8 : f32 to vector<2x2xf32>
    %20 = arith.mulf %19, %16 : vector<2x2xf32>
    %21 = arith.select %18, %16, %20 : vector<2x2xi1>, vector<2x2xf32>
    %22 = vector.shape_cast %21 : vector<2x2xf32> to vector<2x1x2xf32>
    %23 = vector.shape_cast %6 : vector<32x2xf32> to vector<1x32x2xf32>
    %24 = vector.broadcast %22 : vector<2x1x2xf32> to vector<2x32x2xf32>
    %25 = vector.broadcast %23 : vector<1x32x2xf32> to vector<2x32x2xf32>
    %26 = arith.mulf %24, %25 : vector<2x32x2xf32>
    %cst_14 = arith.constant dense<0.000000e+00> : vector<2x32xf32>
    %27 = vector.multi_reduction <add>, %26, %cst_14 [2] : vector<2x32x2xf32> to vector<2x32xf32>
    %28 = vector.broadcast %7 : vector<1x32xf32> to vector<2x32xf32>
    %29 = arith.addf %27, %28 : vector<2x32xf32>
    %30 = arith.negf %29 : vector<2x32xf32>
    %31 = math.exp %30 : vector<2x32xf32>
    %cst_15 = arith.constant 1.000000e+00 : f32
    %32 = vector.broadcast %cst_15 : f32 to vector<2x32xf32>
    %33 = arith.addf %32, %31 : vector<2x32xf32>
    %34 = arith.divf %32, %33 : vector<2x32xf32>
    %c0_16 = arith.constant 0 : index
    %c0_17 = arith.constant 0 : index
    %c0_18 = arith.constant 0 : index
    %35 = vector.load %arg2[%c0_16, %c0_17, %c0_18] : memref<2x32x256xf32, #tpu.memory_space<vmem>>, vector<2x32x256xf32>
    %36 = vector.shape_cast %34 : vector<2x32xf32> to vector<2x32x1xf32>
    %37 = vector.broadcast %36 : vector<2x32x1xf32> to vector<2x32x256xf32>
    %38 = arith.mulf %35, %37 : vector<2x32x256xf32>
    %c0_19 = arith.constant 0 : index
    %c0_20 = arith.constant 0 : index
    %c0_21 = arith.constant 0 : index
    %39 = vector.load %arg7[%c0_19, %c0_20, %c0_21] : memref<2x32x256xf32, #tpu.memory_space<vmem>>, vector<2x32x256xf32>
    tpu.vector_store %arg7[%c0_19, %c0_20, %c0_21], %38 {strides = array<i32>} : memref<2x32x256xf32, #tpu.memory_space<vmem>>, vector<2x32x256xf32>,
    return
  }
  func.func @transform_0(%arg0: i32) -> i32 {
    %c0_i32 = arith.constant 0 : i32
    %c0_i32_0 = arith.constant 0 : i32
    return %c0_i32 : i32
  }
  func.func @transform_1(%arg0: i32) -> (i32, i32, i32) {
    %c0_i32 = arith.constant 0 : i32
    %c0_i32_0 = arith.constant 0 : i32
    %c0_i32_1 = arith.constant 0 : i32
    return %arg0, %c0_i32, %c0_i32_0 : i32, i32, i32
  }
  func.func @transform_2(%arg0: i32) -> (i32, i32) {
    %c0_i32 = arith.constant 0 : i32
    %c0_i32_0 = arith.constant 0 : i32
    %c0_i32_1 = arith.constant 0 : i32
    return %c0_i32, %c0_i32_0 : i32, i32
  }
  func.func @transform_3(%arg0: i32) -> (i32, i32) {
    %c0_i32 = arith.constant 0 : i32
    %c0_i32_0 = arith.constant 0 : i32
    %c0_i32_1 = arith.constant 0 : i32
    return %c0_i32, %c0_i32_0 : i32, i32
  }
  func.func @transform_4(%arg0: i32) -> (i32, i32) {
    %c0_i32 = arith.constant 0 : i32
    %c0_i32_0 = arith.constant 0 : i32
    %c0_i32_1 = arith.constant 0 : i32
    return %c0_i32, %c0_i32_0 : i32, i32
  }
  func.func @transform_5(%arg0: i32) -> (i32, i32) {
    %c0_i32 = arith.constant 0 : i32
    %c0_i32_0 = arith.constant 0 : i32
    %c0_i32_1 = arith.constant 0 : i32
    return %c0_i32, %c0_i32_0 : i32, i32
  }
  func.func @transform_6(%arg0: i32) -> (i32, i32, i32) {
    %c0_i32 = arith.constant 0 : i32
    %c0_i32_0 = arith.constant 0 : i32
    %c0_i32_1 = arith.constant 0 : i32
    return %arg0, %c0_i32, %c0_i32_0 : i32, i32, i32
  }
}

</mosaic_0001>

<llo_original>
// kernel: tpu_custom_call.1
$region0: #{tpu_custom_call.1}
  #allocation0 [shape = 'u32[]', space=smem, size = 0x4, offset = 0x4, fixed_abs, tag = 'smem constant byte address 0x4 - core index']
  #allocation1 [shape = 'u32[72,128]{1,0:T(1,128)}', space=vmem, size = 0x9000, scoped, tag = 'internal scratch']
  #allocation2 [shape = 'f32[1]{0:T(128)S(6)}', space=smem, size = 0x200, scoped, tag = 'scoped memory for tpu_custom_call.1']
  %s0 = inlined_call_operand.<no memory space> [shape: f32[1], index: 0, kind: input, shape index: {}]
  %s1 = inlined_call_operand.hbm [shape: f32[2,32,256], index: 1, kind: input, shape index: {}]
  %s2 = inlined_call_operand.vmem [shape: f32[32,2], index: 2, kind: input, shape index: {}]
  %s3 = inlined_call_operand.vmem [shape: f32[1,2], index: 3, kind: input, shape index: {}]
  %s4 = inlined_call_operand.vmem [shape: f32[32,2], index: 4, kind: input, shape index: {}]
  %s5 = inlined_call_operand.vmem [shape: f32[1,32], index: 5, kind: input, shape index: {}]
  %s6 = inlined_call_operand.hbm [shape: f32[2,32,256], index: 6, kind: output, shape index: {}]
  %s7 = sld [smem:[#allocation0]]
  $region38: #{tpu_custom_call.1} parent=0
    _
  %s9 = ssub.s32 1, %s7
  %s10 = scalar_select 0, %s9, %s7
  %11 = sst [smem:[#allocation2]] %s0
  $region1: #{tpu_custom_call.1} parent=0
    #allocation3 [shape = 'u8[65536]{0}', space=vmem, size = 0x10000, scoped, tag = 'input window, operand 1, single buffered']
    #allocation4 [shape = 's32[1]{0}', space=sflag, size = 0x4, scoped, tag = 'scoped memory for tpu_custom_call.1']
    #allocation5 [shape = 's32[1]{0}', space=sflag, size = 0x4, scoped, tag = 'scoped memory for tpu_custom_call.1']
    #allocation6 [shape = 'u8[65536]{0}', space=vmem, size = 0x10000, scoped, tag = 'output window, operand 0, single buffered']
    %12 = vsyncpa [#allocation4], 0
    %13 = vsyncpa [#allocation5], 0
    // Predicated region
    $region2: #{tpu_custom_call.1} parent=1 // pred_check
      _
    $region3: #{tpu_custom_call.1} parent=1 // pred_check_branch
      %15 = sbr.rel (0) target = $region5
    $region4: #{tpu_custom_call.1} parent=1 // pred_region
      _
    $region5: #{tpu_custom_call.1} parent=1 // pred_fallthru
      _
    // Predicated region
    $region6: #{tpu_custom_call.1} parent=1 // pred_check
      _
    $region7: #{tpu_custom_call.1} parent=1 // pred_check_branch
      %17 = sbr.rel (0) target = $region9
    $region8: #{tpu_custom_call.1} parent=1 // pred_region
      %19 = vsyncadd [#allocation4], 0
      %s20 = sshll.u32 %s1, 4
      %s21 = int_to_ptr.hbm [resolvable:$true] %s20
      %s22 = sshll.u32 [#allocation3], 4
      %s23 = int_to_ptr.vmem [resolvable:$true] %s22
      %28 = dma.hbm_to_vmem [thread:$0]  %s21, 2048, %s23, [#allocation4], 256, 256, 16
    $region9: #{tpu_custom_call.1} parent=1 // pred_fallthru
      _
    // Predicated region
    $region10: #{tpu_custom_call.1} parent=1 // pred_check
      _
    $region11: #{tpu_custom_call.1} parent=1 // pred_check_branch
      %30 = sbr.rel (0) target = $region13
    $region12: #{tpu_custom_call.1} parent=1 // pred_region
      _
    $region13: #{tpu_custom_call.1} parent=1 // pred_fallthru
      _
    // Predicated region
    $region14: #{tpu_custom_call.1} parent=1 // pred_check
      _
    $region15: #{tpu_custom_call.1} parent=1 // pred_check_branch
      %32 = sbr.rel (0) target = $region17
    $region16: #{tpu_custom_call.1} parent=1 // pred_region
      _
    $region17: #{tpu_custom_call.1} parent=1 // pred_fallthru
      _
    // Predicated region
    $region18: #{tpu_custom_call.1} parent=1 // pred_check
      _
    $region19: #{tpu_custom_call.1} parent=1 // pred_check_branch
      %34 = sbr.rel (0) target = $region21
    $region20: #{tpu_custom_call.1} parent=1 // pred_region
      _
    $region21: #{tpu_custom_call.1} parent=1 // pred_fallthru
      _
    // Predicated region
    $region22: #{tpu_custom_call.1} parent=1 // pred_check
      _
    $region23: #{tpu_custom_call.1} parent=1 // pred_check_branch
      %36 = sbr.rel (0) target = $region25
    $region24: #{tpu_custom_call.1} parent=1 // pred_region
      _
    $region25: #{tpu_custom_call.1} parent=1 // pred_fallthru
      _
    // Predicated region
    $region26: #{tpu_custom_call.1} parent=1 // pred_check
      _
    $region27: #{tpu_custom_call.1} parent=1 // pred_check_branch
      %38 = sbr.rel (0) target = $region29
    $region28: #{tpu_custom_call.1} parent=1 // pred_region
      %40 = dma.done [#allocation4], 2048
    $region29: #{tpu_custom_call.1} parent=1 // pred_fallthru
      _
    %v41 = vld [vmem:[#allocation3] sm:$0xff]
    %v42 = vld [vmem:[#allocation3 + $0x8] sm:$0xff]
    %v43 = vld [vmem:[#allocation3 + $0x10] sm:$0xff]
    %v44 = vld [vmem:[#allocation3 + $0x18] sm:$0xff]
    %v45 = vld [vmem:[#allocation3 + $0x20] sm:$0xff]
    %v46 = vld [vmem:[#allocation3 + $0x28] sm:$0xff]
    %v47 = vld [vmem:[#allocation3 + $0x30] sm:$0xff]
    %v48 = vld [vmem:[#allocation3 + $0x38] sm:$0xff]
    %v49 = vld [vmem:[#allocation3 + $0x40] sm:$0xff]
    %v50 = vld [vmem:[#allocation3 + $0x48] sm:$0xff]
    %v51 = vld [vmem:[#allocation3 + $0x50] sm:$0xff]
    %v52 = vld [vmem:[#allocation3 + $0x58] sm:$0xff]
    %v53 = vld [vmem:[#allocation3 + $0x60] sm:$0xff]
    %v54 = vld [vmem:[#allocation3 + $0x68] sm:$0xff]
    %v55 = vld [vmem:[#allocation3 + $0x70] sm:$0xff]
    %v56 = vld [vmem:[#allocation3 + $0x78] sm:$0xff]
    %v57 = vadd.f32 %v41, %v42
    %58 = vadd.xlane.f32.xlu0 %v57
    %v59 = vpop.xlane.xlu0 %58
    %v60 = vadd.f32 %v43, %v44
    %61 = vadd.xlane.f32.xlu0 %v60
    %v62 = vpop.xlane.xlu0 %61
    %v63 = vadd.f32 %v45, %v46
    %64 = vadd.xlane.f32.xlu0 %v63
    %v65 = vpop.xlane.xlu0 %64
    %v66 = vadd.f32 %v47, %v48
    %67 = vadd.xlane.f32.xlu0 %v66
    %v68 = vpop.xlane.xlu0 %67
    %v69 = vadd.f32 %v49, %v50
    %70 = vadd.xlane.f32.xlu0 %v69
    %v71 = vpop.xlane.xlu0 %70
    %v72 = vadd.f32 %v51, %v52
    %73 = vadd.xlane.f32.xlu0 %v72
    %v74 = vpop.xlane.xlu0 %73
    %v75 = vadd.f32 %v53, %v54
    %76 = vadd.xlane.f32.xlu0 %v75
    %v77 = vpop.xlane.xlu0 %76
    %v78 = vadd.f32 %v55, %v56
    %79 = vadd.xlane.f32.xlu0 %v78
    %v80 = vpop.xlane.xlu0 %79
    %v81 = vmul.f32 %v59, 0.00390625
    %v82 = vmul.f32 %v62, 0.00390625
    %v83 = vmul.f32 %v65, 0.00390625
    %v84 = vmul.f32 %v68, 0.00390625
    %v85 = vmul.f32 %v71, 0.00390625
    %v86 = vmul.f32 %v74, 0.00390625
    %v87 = vmul.f32 %v77, 0.00390625
    %v88 = vmul.f32 %v80, 0.00390625
    %v89 = vld [vmem:[%s2] sm:$0xff]
    %v90 = vld [vmem:[%s2 + $0x8] sm:$0xff]
    %v91 = vld [vmem:[%s2 + $0x10] sm:$0xff]
    %v92 = vld [vmem:[%s2 + $0x18] sm:$0xff]
    %v93 = vld [vmem:[%s3] sm:$0x1]
    %v94 = vld [vmem:[%s4] sm:$0xff]
    %v95 = vld [vmem:[%s4 + $0x8] sm:$0xff]
    %v96 = vld [vmem:[%s4 + $0x10] sm:$0xff]
    %v97 = vld [vmem:[%s4 + $0x18] sm:$0xff]
    %v98 = vld [vmem:[%s5] sm:$0x1]
    %s99 = sld [smem:[#allocation2]]
    %v100 = vmul.f32 %v81, %v89
    %v101 = vmul.f32 %v82, %v90
    %v102 = vmul.f32 %v83, %v91
    %v103 = vmul.f32 %v84, %v92
    %v104 = vmul.f32 %v85, %v89
    %v105 = vmul.f32 %v86, %v90
    %v106 = vmul.f32 %v87, %v91
    %v107 = vmul.f32 %v88, %v92
    %vm108 = vcmask 15360
    %v109 = vsel %vm108, %v100, 0.0
    %v110 = vsel %vm108, %v101, 0.0
    %v111 = vadd.f32 %v109, %v110
    %v112 = vsel %vm108, %v102, 0.0
    %v113 = vadd.f32 %v111, %v112
    %v114 = vsel %vm108, %v103, 0.0
    %v115 = vadd.f32 %v113, %v114
    %v116 = vrot.slane %v115, 4
    %v117 = vadd.f32 %v115, %v116
    %v118 = vrot.slane %v117, 2
    %v119 = vadd.f32 %v117, %v118
    %v120 = vrot.slane %v119, 1
    %v121 = vadd.f32 %v119, %v120
    %v122 = vsel %vm108, %v104, 0.0
    %v123 = vsel %vm108, %v105, 0.0
    %v124 = vadd.f32 %v122, %v123
    %v125 = vsel %vm108, %v106, 0.0
    %v126 = vadd.f32 %v124, %v125
    %v127 = vsel %vm108, %v107, 0.0
    %v128 = vadd.f32 %v126, %v127
    %v129 = vrot.slane %v128, 4
    %v130 = vadd.f32 %v128, %v129
    %v131 = vrot.slane %v130, 2
    %v132 = vadd.f32 %v130, %v131
    %v133 = vrot.slane %v132, 1
    %v134 = vadd.f32 %v132, %v133
    %v136 = vperm.slane %v93, 0
    %v138 = vadd.f32 %v121, %v136
    %v139 = vadd.f32 %v134, %v136
    %vm140 = vcmp.ge.f32.partialorder %v138, 0.0
    %vm141 = vcmp.ge.f32.partialorder %v139, 0.0
    %v142 = vstv %s99
    %v143 = vmul.f32 %v142, %v138
    %v144 = vmul.f32 %v142, %v139
    %v145 = vsel %vm140, %v138, %v143
    %v146 = vsel %vm141, %v139, %v144
    %v147 = vperm.slane %v145, 0
    %v148 = vperm.slane %v146, 0
    %v149 = vmul.f32 %v147, %v94
    %v150 = vmul.f32 %v147, %v95
    %v151 = vmul.f32 %v147, %v96
    %v152 = vmul.f32 %v147, %v97
    %v153 = vmul.f32 %v148, %v94
    %v154 = vmul.f32 %v148, %v95
    %v155 = vmul.f32 %v148, %v96
    %v156 = vmul.f32 %v148, %v97
    %v157 = vsel %vm108, %v149, 0.0
    %158 = vadd.xlane.f32.xlu0 %v157
    %v159 = vpop.xlane.xlu0 %158
    %v160 = vsel %vm108, %v150, 0.0
    %161 = vadd.xlane.f32.xlu0 %v160
    %v162 = vpop.xlane.xlu0 %161
    %v163 = vsel %vm108, %v151, 0.0
    %164 = vadd.xlane.f32.xlu0 %v163
    %v165 = vpop.xlane.xlu0 %164
    %v166 = vsel %vm108, %v152, 0.0
    %167 = vadd.xlane.f32.xlu0 %v166
    %v168 = vpop.xlane.xlu0 %167
    %v169 = vsel %vm108, %v153, 0.0
    %170 = vadd.xlane.f32.xlu0 %v169
    %v171 = vpop.xlane.xlu0 %170
    %v172 = vsel %vm108, %v154, 0.0
    %173 = vadd.xlane.f32.xlu0 %v172
    %v174 = vpop.xlane.xlu0 %173
    %v175 = vsel %vm108, %v155, 0.0
    %176 = vadd.xlane.f32.xlu0 %v175
    %v177 = vpop.xlane.xlu0 %176
    %v178 = vsel %vm108, %v156, 0.0
    %179 = vadd.xlane.f32.xlu0 %v178
    %v180 = vpop.xlane.xlu0 %179
    %v182 = vperm.slane %v98, 0
    %v183 = vlaneseq
    %v184 = vshrl.u32 %v183, 7
    %186 = vset.pattern.permute.xlu0 %v184
    %187 = vperm.xlu0 %186, %v182
    %v188 = vpop.permute.xlu0 %187
    %v189 = vlaneseq
    %v190 = vshrl.u32 %v189, 7
    %v191 = vadd.s32 %v190, 8
    %192 = vset.pattern.permute.xlu0 %v191
    %193 = vperm.xlu0 %192, %v182
    %v194 = vpop.permute.xlu0 %193
    %v195 = vlaneseq
    %v196 = vshrl.u32 %v195, 7
    %v197 = vadd.s32 %v196, 16
    %198 = vset.pattern.permute.xlu0 %v197
    %199 = vperm.xlu0 %198, %v182
    %v200 = vpop.permute.xlu0 %199
    %v201 = vlaneseq
    %v202 = vshrl.u32 %v201, 7
    %v203 = vadd.s32 %v202, 24
    %204 = vset.pattern.permute.xlu0 %v203
    %205 = vperm.xlu0 %204, %v182
    %v206 = vpop.permute.xlu0 %205
    %v211 = vadd.f32 %v159, %v188
    %v212 = vadd.f32 %v162, %v194
    %v213 = vadd.f32 %v165, %v200
    %v214 = vadd.f32 %v168, %v206
    %v215 = vadd.f32 %v171, %v188
    %v216 = vadd.f32 %v174, %v194
    %v217 = vadd.f32 %v177, %v200
    %v218 = vadd.f32 %v180, %v206
    %v219 = vxor.u32 %v211, 2147483648
    %v220 = vxor.u32 %v212, 2147483648
    %v221 = vxor.u32 %v213, 2147483648
    %v222 = vxor.u32 %v214, 2147483648
    %v223 = vxor.u32 %v215, 2147483648
    %v224 = vxor.u32 %v216, 2147483648
    %v225 = vxor.u32 %v217, 2147483648
    %v226 = vxor.u32 %v218, 2147483648
    %v227 = vmul.f32 %v219, 1.442695
    %v228 = vpow.pop %v227
    %v229 = vmul.f32 %v220, 1.442695
    %v230 = vpow.pop %v229
    %v231 = vmul.f32 %v221, 1.442695
    %v232 = vpow.pop %v231
    %v233 = vmul.f32 %v222, 1.442695
    %v234 = vpow.pop %v233
    %v235 = vmul.f32 %v223, 1.442695
    %v236 = vpow.pop %v235
    %v237 = vmul.f32 %v224, 1.442695
    %v238 = vpow.pop %v237
    %v239 = vmul.f32 %v225, 1.442695
    %v240 = vpow.pop %v239
    %v241 = vmul.f32 %v226, 1.442695
    %v242 = vpow.pop %v241
    %v243 = vadd.f32 %v228, 1.0
    %v244 = vadd.f32 %v230, 1.0
    %v245 = vadd.f32 %v232, 1.0
    %v246 = vadd.f32 %v234, 1.0
    %v247 = vadd.f32 %v236, 1.0
    %v248 = vadd.f32 %v238, 1.0
    %v249 = vadd.f32 %v240, 1.0
    %v250 = vadd.f32 %v242, 1.0
    %v251 = vrcp.pop %v243
    %v252 = vmul.f32 %v243, %v251
    %v253 = vsub.f32 1.0, %v252
    %v254 = vmul.f32 %v251, %v253
    %v255 = vadd.f32 %v251, %v254
    %vm256 = vweird.f32 %v243
    %vm257 = vweird.f32 %v251
    %vm258 = vmor %vm256, %vm257
    %v259 = vsel %vm258, %v251, %v255
    %v260 = vand.u32 2147483647, %v243
    %vm261 = vcmp.eq.f32.partialorder %v260, 8.507059e+37
    %v262 = vand.u32 %v243, 2147483648
    %v263 = vor.u32 1.1754944e-38, %v262
    %v264 = vsel %vm261, %v263, %v259
    %v265 = vmul.f32 1.0, %v264
    %v266 = vrcp.pop %v244
    %v267 = vmul.f32 %v244, %v266
    %v268 = vsub.f32 1.0, %v267
    %v269 = vmul.f32 %v266, %v268
    %v270 = vadd.f32 %v266, %v269
    %vm271 = vweird.f32 %v244
    %vm272 = vweird.f32 %v266
    %vm273 = vmor %vm271, %vm272
    %v274 = vsel %vm273, %v266, %v270
    %v275 = vand.u32 2147483647, %v244
    %vm276 = vcmp.eq.f32.partialorder %v275, 8.507059e+37
    %v277 = vand.u32 %v244, 2147483648
    %v278 = vor.u32 1.1754944e-38, %v277
    %v279 = vsel %vm276, %v278, %v274
    %v280 = vmul.f32 1.0, %v279
    %v281 = vrcp.pop %v245
    %v282 = vmul.f32 %v245, %v281
    %v283 = vsub.f32 1.0, %v282
    %v284 = vmul.f32 %v281, %v283
    %v285 = vadd.f32 %v281, %v284
    %vm286 = vweird.f32 %v245
    %vm287 = vweird.f32 %v281
    %vm288 = vmor %vm286, %vm287
    %v289 = vsel %vm288, %v281, %v285
    %v290 = vand.u32 2147483647, %v245
    %vm291 = vcmp.eq.f32.partialorder %v290, 8.507059e+37
    %v292 = vand.u32 %v245, 2147483648
    %v293 = vor.u32 1.1754944e-38, %v292
    %v294 = vsel %vm291, %v293, %v289
    %v295 = vmul.f32 1.0, %v294
    %v296 = vrcp.pop %v246
    %v297 = vmul.f32 %v246, %v296
    %v298 = vsub.f32 1.0, %v297
    %v299 = vmul.f32 %v296, %v298
    %v300 = vadd.f32 %v296, %v299
    %vm301 = vweird.f32 %v246
    %vm302 = vweird.f32 %v296
    %vm303 = vmor %vm301, %vm302
    %v304 = vsel %vm303, %v296, %v300
    %v305 = vand.u32 2147483647, %v246
    %vm306 = vcmp.eq.f32.partialorder %v305, 8.507059e+37
    %v307 = vand.u32 %v246, 2147483648
    %v308 = vor.u32 1.1754944e-38, %v307
    %v309 = vsel %vm306, %v308, %v304
    %v310 = vmul.f32 1.0, %v309
    %v311 = vrcp.pop %v247
    %v312 = vmul.f32 %v247, %v311
    %v313 = vsub.f32 1.0, %v312
    %v314 = vmul.f32 %v311, %v313
    %v315 = vadd.f32 %v311, %v314
    %vm316 = vweird.f32 %v247
    %vm317 = vweird.f32 %v311
    %vm318 = vmor %vm316, %vm317
    %v319 = vsel %vm318, %v311, %v315
    %v320 = vand.u32 2147483647, %v247
    %vm321 = vcmp.eq.f32.partialorder %v320, 8.507059e+37
    %v322 = vand.u32 %v247, 2147483648
    %v323 = vor.u32 1.1754944e-38, %v322
    %v324 = vsel %vm321, %v323, %v319
    %v325 = vmul.f32 1.0, %v324
    %v326 = vrcp.pop %v248
    %v327 = vmul.f32 %v248, %v326
    %v328 = vsub.f32 1.0, %v327
    %v329 = vmul.f32 %v326, %v328
    %v330 = vadd.f32 %v326, %v329
    %vm331 = vweird.f32 %v248
    %vm332 = vweird.f32 %v326
    %vm333 = vmor %vm331, %vm332
    %v334 = vsel %vm333, %v326, %v330
    %v335 = vand.u32 2147483647, %v248
    %vm336 = vcmp.eq.f32.partialorder %v335, 8.507059e+37
    %v337 = vand.u32 %v248, 2147483648
    %v338 = vor.u32 1.1754944e-38, %v337
    %v339 = vsel %vm336, %v338, %v334
    %v340 = vmul.f32 1.0, %v339
    %v341 = vrcp.pop %v249
    %v342 = vmul.f32 %v249, %v341
    %v343 = vsub.f32 1.0, %v342
    %v344 = vmul.f32 %v341, %v343
    %v345 = vadd.f32 %v341, %v344
    %vm346 = vweird.f32 %v249
    %vm347 = vweird.f32 %v341
    %vm348 = vmor %vm346, %vm347
    %v349 = vsel %vm348, %v341, %v345
    %v350 = vand.u32 2147483647, %v249
    %vm351 = vcmp.eq.f32.partialorder %v350, 8.507059e+37
    %v352 = vand.u32 %v249, 2147483648
    %v353 = vor.u32 1.1754944e-38, %v352
    %v354 = vsel %vm351, %v353, %v349
    %v355 = vmul.f32 1.0, %v354
    %v356 = vrcp.pop %v250
    %v357 = vmul.f32 %v250, %v356
    %v358 = vsub.f32 1.0, %v357
    %v359 = vmul.f32 %v356, %v358
    %v360 = vadd.f32 %v356, %v359
    %vm361 = vweird.f32 %v250
    %vm362 = vweird.f32 %v356
    %vm363 = vmor %vm361, %vm362
    %v364 = vsel %vm363, %v356, %v360
    %v365 = vand.u32 2147483647, %v250
    %vm366 = vcmp.eq.f32.partialorder %v365, 8.507059e+37
    %v367 = vand.u32 %v250, 2147483648
    %v368 = vor.u32 1.1754944e-38, %v367
    %v369 = vsel %vm366, %v368, %v364
    %v370 = vmul.f32 1.0, %v369
    %372 = vset.pattern.permute.xlu0 0
    %373 = vperm.xlu0 %372, %v265
    %v374 = vpop.permute.xlu0 %373
    %377 = vset.pattern.permute.xlu0 0
    %378 = vperm.xlu0 %377, %v280
    %v379 = vpop.permute.xlu0 %378
    %382 = vset.pattern.permute.xlu0 0
    %383 = vperm.xlu0 %382, %v295
    %v384 = vpop.permute.xlu0 %383
    %387 = vset.pattern.permute.xlu0 0
    %388 = vperm.xlu0 %387, %v310
    %v389 = vpop.permute.xlu0 %388
    %392 = vset.pattern.permute.xlu0 0
    %393 = vperm.xlu0 %392, %v325
    %v394 = vpop.permute.xlu0 %393
    %397 = vset.pattern.permute.xlu0 0
    %398 = vperm.xlu0 %397, %v340
    %v399 = vpop.permute.xlu0 %398
    %402 = vset.pattern.permute.xlu0 0
    %403 = vperm.xlu0 %402, %v355
    %v404 = vpop.permute.xlu0 %403
    %407 = vset.pattern.permute.xlu0 0
    %408 = vperm.xlu0 %407, %v370
    %v409 = vpop.permute.xlu0 %408
    %v411 = vmul.f32 %v41, %v374
    %v412 = vmul.f32 %v42, %v374
    %v413 = vmul.f32 %v43, %v379
    %v414 = vmul.f32 %v44, %v379
    %v415 = vmul.f32 %v45, %v384
    %v416 = vmul.f32 %v46, %v384
    %v417 = vmul.f32 %v47, %v389
    %v418 = vmul.f32 %v48, %v389
    %v419 = vmul.f32 %v49, %v394
    %v420 = vmul.f32 %v50, %v394
    %v421 = vmul.f32 %v51, %v399
    %v422 = vmul.f32 %v52, %v399
    %v423 = vmul.f32 %v53, %v404
    %v424 = vmul.f32 %v54, %v404
    %v425 = vmul.f32 %v55, %v409
    %v426 = vmul.f32 %v56, %v409
    %427 = vst [vmem:[#allocation6] sm:$0xff] %v411
    %428 = vst [vmem:[#allocation6 + $0x8] sm:$0xff] %v412
    %429 = vst [vmem:[#allocation6 + $0x10] sm:$0xff] %v413
    %430 = vst [vmem:[#allocation6 + $0x18] sm:$0xff] %v414
    %431 = vst [vmem:[#allocation6 + $0x20] sm:$0xff] %v415
    %432 = vst [vmem:[#allocation6 + $0x28] sm:$0xff] %v416
    %433 = vst [vmem:[#allocation6 + $0x30] sm:$0xff] %v417
    %434 = vst [vmem:[#allocation6 + $0x38] sm:$0xff] %v418
    %435 = vst [vmem:[#allocation6 + $0x40] sm:$0xff] %v419
    %436 = vst [vmem:[#allocation6 + $0x48] sm:$0xff] %v420
    %437 = vst [vmem:[#allocation6 + $0x50] sm:$0xff] %v421
    %438 = vst [vmem:[#allocation6 + $0x58] sm:$0xff] %v422
    %439 = vst [vmem:[#allocation6 + $0x60] sm:$0xff] %v423
    %440 = vst [vmem:[#allocation6 + $0x68] sm:$0xff] %v424
    %441 = vst [vmem:[#allocation6 + $0x70] sm:$0xff] %v425
    %442 = vst [vmem:[#allocation6 + $0x78] sm:$0xff] %v426
    // Predicated region
    $region30: #{tpu_custom_call.1} parent=1 // pred_check
      _
    $region31: #{tpu_custom_call.1} parent=1 // pred_check_branch
      %444 = sbr.rel (0) target = $region33
    $region32: #{tpu_custom_call.1} parent=1 // pred_region
      %446 = vsyncadd [#allocation5], 0
      %s447 = sshll.u32 [#allocation6], 4
      %s448 = int_to_ptr.vmem [resolvable:$true] %s447
      %s449 = sshll.u32 %s6, 4
      %s450 = int_to_ptr.hbm [resolvable:$true] %s449
      %455 = dma.vmem_to_hbm [thread:$0]  %s448, 2048, %s450, [#allocation5], 256, 256, 16
    $region33: #{tpu_custom_call.1} parent=1 // pred_fallthru
      _
    // Predicated region
    $region34: #{tpu_custom_call.1} parent=1 // pred_check
      _
    $region35: #{tpu_custom_call.1} parent=1 // pred_check_branch
      %457 = sbr.rel (0) target = $region37
    $region36: #{tpu_custom_call.1} parent=1 // pred_region
      %459 = dma.done [#allocation5], 2048
    $region37: #{tpu_custom_call.1} parent=1 // pred_fallthru
      _
    %460 = vsyncpa [#allocation4], 1
    %461 = vsyncpa [#allocation5], 1

</llo_original>
